<compile_context>
chip_gen: v5e
topology: v5e:2x2
jax: 0.10.0
libtpu: 0.0.40
codegen_flags: <defaults>
</compile_context>

<pallas_src>
import math

import jax
import jax.numpy as jnp
from jax import lax
from jax.experimental import pallas as pl
from jax.experimental.pallas import tpu as pltpu


# --------------------------------------------------------------------------- helpers
def _round_up(x, m):
    return (x + m - 1) // m * m


def _tile(dim, preferred, align=1):
    """Largest tile <= preferred that divides `dim`, preferring multiples of `align`.

    Small dims stay untiled; only if no aligned divisor exists do we fall back to the full dim.
    """
    if dim <= preferred:
        return dim
    for cand in range(preferred, align - 1, -1):
        if cand % align == 0 and dim % cand == 0:
            return cand
    # TODO(synk): pad + remainder-mask ragged dims instead of the full-dim fallback.
    return dim


def _padded_bytes(shape, dtype):
    """VMEM footprint of one buffer including (sublane, lane) tile padding."""
    itemsize = jnp.dtype(dtype).itemsize
    dims = list(shape)
    dims[-1] = _round_up(dims[-1], 128)
    if len(dims) >= 2:
        dims[-2] = _round_up(dims[-2], 8 * max(1, 4 // itemsize))
    return math.prod(dims) * itemsize


def _vmem_limit(block_bytes, scratch_bytes):
    """Explicit scoped-VMEM budget: double-buffered blocks + scratch + headroom."""
    est = 2 * block_bytes + scratch_bytes
    est = int(est * 1.5) + (4 << 20)
    return max(8 << 20, min(est, 64 << 20))      # stay within v7x physical VMEM


# ---------------------------------------------------------------------------
# Tiled linear: x @ W_t + b   (W_t pre-transposed & bf16, f32 K-accumulation in VMEM)
# ---------------------------------------------------------------------------
def _linear_kernel(x_ref, w_ref, b_ref, o_ref, acc_ref):
    # x_ref: (tm, tk), w_ref: (tk, tn) bf16, b_ref: (1, tn) f32, o_ref: (tm, tn)
    k = pl.program_id(2)

    @pl.when(k == 0)
    def _init():
        acc_ref[...] = jnp.zeros(acc_ref.shape, acc_ref.dtype)

    # bf16 x bf16 -> f32 on the MXU.
    acc_ref[...] += jnp.dot(x_ref[...].astype(jnp.bfloat16), w_ref[...],
                            preferred_element_type=jnp.float32)

    @pl.when(k == pl.num_programs(2) - 1)
    def _finalize():
        o_ref[...] = (acc_ref[...] + b_ref[...].astype(jnp.float32)).astype(o_ref.dtype)


def linear(x, w_t, b, *, out_dtype=None, tm=256, tn=256, tk=512):
    """x: [..., K] @ w_t: [K, N] (bf16, pre-transposed) + b: [N] -> [..., N]."""
    lead = x.shape[:-1]
    K = x.shape[-1]
    Kw, N = w_t.shape
    assert Kw == K
    M = math.prod(lead)
    out_dtype = out_dtype or x.dtype
    x2 = x.reshape(M, K)                      # collapse (B, S) -> M (free metadata reshape)
    b2 = b.reshape(1, N)

    tm = _tile(M, tm, 16)                     # 16-row alignment is safe for bf16 outputs too
    tn = _tile(N, tn, 128)
    tk = _tile(K, tk, 128)

    block_bytes = (_padded_bytes((tm, tk), x.dtype) + _padded_bytes((tk, tn), w_t.dtype)
                   + _padded_bytes((1, tn), b.dtype) + _padded_bytes((tm, tn), out_dtype))
    scratch_bytes = (_padded_bytes((tm, tn), jnp.float32)
                     + _padded_bytes((tm, tk), jnp.bfloat16))        # x-cast temporary headroom

    out = pl.pallas_call(
        _linear_kernel,
        out_shape=jax.ShapeDtypeStruct((M, N), out_dtype),
        grid_spec=pltpu.PrefetchScalarGridSpec(
            num_scalar_prefetch=0,
            grid=(M // tm, N // tn, K // tk),
            in_specs=[
                pl.BlockSpec((tm, tk), lambda i, j, k: (i, k)),
                pl.BlockSpec((tk, tn), lambda i, j, k: (k, j)),
                pl.BlockSpec((1, tn), lambda i, j, k: (0, j)),
            ],
            out_specs=pl.BlockSpec((tm, tn), lambda i, j, k: (i, j)),
            scratch_shapes=[pltpu.VMEM((tm, tn), jnp.float32)],
        ),
        compiler_params=pltpu.CompilerParams(
            dimension_semantics=("parallel", "parallel", "arbitrary"),
            vmem_limit_bytes=_vmem_limit(block_bytes, scratch_bytes)),
    )(x2, w_t, b2)
    return out.reshape(*lead, N)


# ---------------------------------------------------------------------------
# Flash-style attention: online softmax over KV tiles, all heads per grid step
# ---------------------------------------------------------------------------
def _attn_kernel(q_ref, k_ref, v_ref, mask_ref, o_ref, m_sc, l_sc, acc_sc):
    # q_ref: (tq, heads, D) bf16; k_ref/v_ref: (tkv, heads, D) bf16; mask_ref: (tq, tkv)
    # o_ref: (tq, heads*D); m_sc/l_sc: (heads, tq, 1) f32; acc_sc: (heads, tq, D) f32
    j = pl.program_id(2)
    heads = q_ref.shape[1]

    @pl.when(j == 0)
    def _init():
        m_sc[...] = jnp.full(m_sc.shape, -jnp.inf, dtype=m_sc.dtype)
        l_sc[...] = jnp.zeros(l_sc.shape, l_sc.dtype)
        acc_sc[...] = jnp.zeros(acc_sc.shape, acc_sc.dtype)

    bias = mask_ref[...].astype(jnp.float32)   # (tq, tkv): fetched once, shared by all heads
    q_all = q_ref[...]                         # (tq, heads, D)   (1/sqrt(D) pre-folded into Wq)
    k_all = k_ref[...]                         # (tkv, heads, D)
    v_all = v_ref[...]

    # Static unroll over heads: bf16 MXU matmuls, softmax math kept in f32 (v5e-safe).
    for h in range(heads):
        q = q_all[:, h, :]                     # (tq, D)
        k = k_all[:, h, :]                     # (tkv, D)
        v = v_all[:, h, :]                     # (tkv, D)

        # QK^T: contract the D axis of both operands directly (no explicit transpose).
        s = lax.dot_general(q, k, (((1,), (1,)), ((), ())),
                            preferred_element_type=jnp.float32)      # (tq, tkv) f32
        s = s + bias

        m_prev = m_sc[h]                       # (tq, 1)
        m_new = jnp.maximum(m_prev, jnp.max(s, axis=-1, keepdims=True))
        alpha = jnp.exp(m_prev - m_new)
        p = jnp.exp(s - m_new)
        l_sc[h] = alpha * l_sc[h] + jnp.sum(p, axis=-1, keepdims=True)
        acc_sc[h] = alpha * acc_sc[h] + jnp.dot(p.astype(v.dtype), v,
                                                preferred_element_type=jnp.float32)
        m_sc[h] = m_new

    @pl.when(j == pl.num_programs(2) - 1)
    def _finalize():
        # Normalize per head (exact divide) and pack back to a lane-dense (tq, heads*D) tile.
        pieces = [(acc_sc[h] / l_sc[h]).astype(o_ref.dtype) for h in range(heads)]
        o_ref[...] = jnp.concatenate(pieces, axis=-1)


def _attention_call(q_arg, k_arg, v_arg, mask, *, packed, B, S, heads, D, out_dtype,
                    tq=128, tkv=512):
    H = heads * D
    tq = _tile(S, tq, 8)
    tkv = _tile(S, tkv, 128)

    if packed:
        # q/k/v are the same (B, S, 3, heads, D) array; select q/k/v via index on the "3" axis.
        q_spec = pl.BlockSpec((None, tq, None, heads, D), lambda b, i, j: (b, i, 0, 0, 0))
        k_spec = pl.BlockSpec((None, tkv, None, heads, D), lambda b, i, j: (b, j, 1, 0, 0))
        v_spec = pl.BlockSpec((None, tkv, None, heads, D), lambda b, i, j: (b, j, 2, 0, 0))
    else:
        q_spec = pl.BlockSpec((None, tq, heads, D), lambda b, i, j: (b, i, 0, 0))
        k_spec = pl.BlockSpec((None, tkv, heads, D), lambda b, i, j: (b, j, 0, 0))
        v_spec = pl.BlockSpec((None, tkv, heads, D), lambda b, i, j: (b, j, 0, 0))
    mask_spec = pl.BlockSpec((None, None, tq, tkv), lambda b, i, j: (b, 0, i, j))
    out_spec = pl.BlockSpec((None, tq, H), lambda b, i, j: (b, i, 0))

    in_dt = q_arg.dtype
    block_bytes = (_padded_bytes((tq, heads, D), in_dt)
                   + 2 * _padded_bytes((tkv, heads, D), in_dt)
                   + _padded_bytes((tq, tkv), mask.dtype)
                   + _padded_bytes((tq, H), out_dtype))
    scratch_bytes = (2 * _padded_bytes((heads, tq, 1), jnp.float32)
                     + _padded_bytes((heads, tq, D), jnp.float32)
                     + 4 * _padded_bytes((tq, tkv), jnp.float32))    # score/prob temporaries

    return pl.pallas_call(
        _attn_kernel,
        out_shape=jax.ShapeDtypeStruct((B, S, H), out_dtype),
        grid_spec=pltpu.PrefetchScalarGridSpec(
            num_scalar_prefetch=0,
            grid=(B, S // tq, S // tkv),          # KV axis innermost / "arbitrary"
            in_specs=[q_spec, k_spec, v_spec, mask_spec],
            out_specs=out_spec,
            scratch_shapes=[
                pltpu.VMEM((heads, tq, 1), jnp.float32),   # running max
                pltpu.VMEM((heads, tq, 1), jnp.float32),   # running denominator
                pltpu.VMEM((heads, tq, D), jnp.float32),   # unnormalized context
            ],
        ),
        compiler_params=pltpu.CompilerParams(
            dimension_semantics=("parallel", "parallel", "arbitrary"),
            vmem_limit_bytes=_vmem_limit(block_bytes, scratch_bytes)),
    )(q_arg, k_arg, v_arg, mask)


def attention_packed(qkv5, mask, *, tq=128, tkv=512):
    """qkv5: [B, S, 3, heads, D] fused-projection output -> context [B, S, heads*D]."""
    B, S, _, heads, D = qkv5.shape
    return _attention_call(qkv5, qkv5, qkv5, mask, packed=True, B=B, S=S, heads=heads,
                           D=D, out_dtype=qkv5.dtype, tq=tq, tkv=tkv)


def attention_separate(q4, k4, v4, mask, *, tq=128, tkv=512):
    """q4/k4/v4: [B, S, heads, D] -> context [B, S, heads*D]."""
    B, S, heads, D = q4.shape
    return _attention_call(q4, k4, v4, mask, packed=False, B=B, S=S, heads=heads,
                           D=D, out_dtype=q4.dtype, tq=tq, tkv=tkv)


# ---------------------------------------------------------------------------
# Module wrapper
# ---------------------------------------------------------------------------
class MultiHeadedAttentionPallas:
    def __init__(self, hidden_size, heads_num, dropout, key):
        assert hidden_size % heads_num == 0
        self.hidden_size = hidden_size
        self.heads_num = heads_num
        self.per_head_size = hidden_size // heads_num
        self.dropout = dropout
        scale = 1.0 / math.sqrt(float(self.per_head_size))

        keys = jax.random.split(key, 8)

        def mk_linear(kw, kb):
            # Weights stored pre-transposed (H_in, H_out) so the MXU consumes them directly.
            w_t = 0.02 * jax.random.normal(kw, (hidden_size, hidden_size), jnp.float32)
            b = 0.01 * jax.random.normal(kb, (hidden_size,), jnp.float32)
            return w_t, b

        # f32 masters (used by the pure-JAX reference).  torch order: [0]=query, [1]=key, [2]=value.
        self.wq_t, self.bq = mk_linear(keys[0], keys[1])
        self.wk_t, self.bk = mk_linear(keys[2], keys[3])
        self.wv_t, self.bv = mk_linear(keys[4], keys[5])
        self.wo_t, self.bo = mk_linear(keys[6], keys[7])

        # Kernel parameters: bf16 weights, 1/sqrt(D) folded into the Q projection (free).
        self.wq_bf = (self.wq_t * scale).astype(jnp.bfloat16)
        self.bq_sc = self.bq * scale
        self.wk_bf = self.wk_t.astype(jnp.bfloat16)
        self.wv_bf = self.wv_t.astype(jnp.bfloat16)
        self.wo_bf = self.wo_t.astype(jnp.bfloat16)
        # Fused QKV for the self-attention fast path (single wide matmul, no output slicing).
        self.w_qkv_bf = jnp.concatenate([self.wq_bf, self.wk_bf, self.wv_bf], axis=1)  # (H, 3H)
        self.b_qkv = jnp.concatenate([self.bq_sc, self.bk, self.bv], axis=0)           # (3H,)

    # TODO(synk): attention-prob dropout omitted (inference mode: nn.Dropout is identity).

    def __call__(self, key, value, query, mask):
        B, S, H = key.shape
        heads, D = self.heads_num, self.per_head_size
        if (query is key) and (key is value):
            # Self-attention: one fused [B,S,H] @ [H,3H] projection; view (free reshape) as
            # [B,S,3,heads,D] and let the attention BlockSpecs pick q/k/v -> no HBM slicing.
            qkv = linear(query, self.w_qkv_bf, self.b_qkv, out_dtype=jnp.bfloat16)
            qkv5 = qkv.reshape(B, S, 3, heads, D)
            ctx = attention_packed(qkv5, mask)                                  # [B,S,H] bf16
        else:
            q4 = linear(query, self.wq_bf, self.bq_sc, out_dtype=jnp.bfloat16).reshape(B, S, heads, D)
            k4 = linear(key, self.wk_bf, self.bk, out_dtype=jnp.bfloat16).reshape(B, S, heads, D)
            v4 = linear(value, self.wv_bf, self.bv, out_dtype=jnp.bfloat16).reshape(B, S, heads, D)
            ctx = attention_separate(q4, k4, v4, mask)                          # [B,S,H] bf16
        return linear(ctx, self.wo_bf, self.bo, out_dtype=jnp.float32)

    # Pure-JAX f32 reference (mirrors the torch module) for correctness checking.
    def reference(self, key, value, query, mask):
        B, S, H = key.shape
        Hn, D = self.heads_num, self.per_head_size

        def lin(x, w_t, b):
            return x @ w_t + b

        def shape_heads(x):
            return x.reshape(B, S, Hn, D).transpose(0, 2, 1, 3)

        q = shape_heads(lin(query, self.wq_t, self.bq))
        k = shape_heads(lin(key, self.wk_t, self.bk))
        v = shape_heads(lin(value, self.wv_t, self.bv))
        scores = jnp.einsum("bhqd,bhkd->bhqk", q, k) / math.sqrt(float(D))
        scores = scores + mask
        probs = jax.nn.softmax(scores, axis=-1)
        ctx = jnp.einsum("bhqk,bhkd->bhqd", probs, v)
        out = ctx.transpose(0, 2, 1, 3).reshape(B, S, H)
        return lin(out, self.wo_t, self.bo)


if __name__ == "__main__":
    B, S, H, Hn = 2, 8, 32, 4

    root = jax.random.PRNGKey(0)
    k_param, k_k, k_v, k_q, k_m = jax.random.split(root, 5)

    mha = MultiHeadedAttentionPallas(hidden_size=H, heads_num=Hn, dropout=0.0, key=k_param)

    key_in = jax.random.normal(k_k, (B, S, H), jnp.float32)
    value_in = jax.random.normal(k_v, (B, S, H), jnp.float32)
    query_in = jax.random.normal(k_q, (B, S, H), jnp.float32)
    # additive attention mask: 0 for allowed, -10000 for masked
    mask_bits = jax.random.bernoulli(k_m, 0.9, (B, 1, S, S))
    mask = jnp.where(mask_bits, 0.0, -10000.0).astype(jnp.float32)

    # Cross-attention style call (distinct K/V/Q tensors -> separate projections).
    out = jax.block_until_ready(mha(key_in, value_in, query_in, mask))
    ref = mha.reference(key_in, value_in, query_in, mask)
    assert out.shape == (B, S, H)
    assert out.dtype == jnp.float32
    # bf16 matmul operands with f32 accumulation: expect ~1e-3-level absolute error here.
    assert jnp.allclose(out, ref, atol=1.5e-2, rtol=2e-2), "mismatch vs reference (cross)"

    # Self-attention call (same tensor -> fused QKV projection + packed attention path).
    out_sa = jax.block_until_ready(mha(query_in, query_in, query_in, mask))
    ref_sa = mha.reference(query_in, query_in, query_in, mask)
    assert jnp.allclose(out_sa, ref_sa, atol=1.5e-2, rtol=2e-2), "mismatch vs reference (self)"

    print("KERNEL_OK")
</pallas_src>

<mosaic_0001>
module attributes {stable_mosaic.version = 11 : i64} {
  func.func @_linear_kernel(%arg0: i32, %arg1: i32, %arg2: i32, %arg3: memref<16x32xf32, #tpu.memory_space<vmem>>, %arg4: memref<32x32xbf16, #tpu.memory_space<vmem>>, %arg5: memref<1x32xf32, #tpu.memory_space<vmem>>, %arg6: memref<16x32xbf16, #tpu.memory_space<vmem>>, %arg7: memref<16x32xf32, #tpu.memory_space<vmem>>) attributes {dimension_semantics = [#tpu.dimension_semantics<parallel>, #tpu.dimension_semantics<parallel>, #tpu.dimension_semantics<arbitrary>], iteration_bounds = array<i64: 1, 1, 1>, scalar_prefetch = 0 : i64, scratch_operands = 1 : i64, tpu.core_type = #tpu.core_type<tc>, window_params = [{transform_indices = @transform_0, window_bounds = array<i64: 16, 32>}, {transform_indices = @transform_1, window_bounds = array<i64: 32, 32>}, {transform_indices = @transform_2, window_bounds = array<i64: 1, 32>}, {transform_indices = @transform_3, window_bounds = array<i64: 16, 32>}]} {
    %c0_i32 = arith.constant 0 : i32
    %0 = arith.cmpi eq, %arg2, %c0_i32 : i32
    %1 = arith.extui %0 : i1 to i32
    %c0_i32_0 = arith.constant 0 : i32
    %2 = arith.cmpi ne, %1, %c0_i32_0 : i32
    scf.if %2 {
      %cst_10 = arith.constant 0.000000e+00 : f32
      %13 = vector.broadcast %cst_10 : f32 to vector<16x32xf32>
      %c0_11 = arith.constant 0 : index
      %c0_12 = arith.constant 0 : index
      %14 = vector.load %arg7[%c0_11, %c0_12] : memref<16x32xf32, #tpu.memory_space<vmem>>, vector<16x32xf32>
      tpu.vector_store %arg7[%c0_11, %c0_12], %13 {strides = array<i32>} : memref<16x32xf32, #tpu.memory_space<vmem>>, vector<16x32xf32>,
    } else {
    }
    %c0 = arith.constant 0 : index
    %c0_1 = arith.constant 0 : index
    %3 = vector.load %arg7[%c0, %c0_1] : memref<16x32xf32, #tpu.memory_space<vmem>>, vector<16x32xf32>
    %c0_2 = arith.constant 0 : index
    %c0_3 = arith.constant 0 : index
    %4 = vector.load %arg3[%c0_2, %c0_3] : memref<16x32xf32, #tpu.memory_space<vmem>>, vector<16x32xf32>
    %5 = arith.truncf %4 : vector<16x32xf32> to vector<16x32xbf16>
    %c0_4 = arith.constant 0 : index
    %c0_5 = arith.constant 0 : index
    %6 = vector.load %arg4[%c0_4, %c0_5] : memref<32x32xbf16, #tpu.memory_space<vmem>>, vector<32x32xbf16>
    %cst = arith.constant dense<0.000000e+00> : vector<16x32xf32>
    %7 = tpu.matmul %5, %6, %cst {dimension_numbers = #tpu.dot_dimension_numbers<[1], [0], [0], [1], [0, 0, 1, 1], [], []>} : vector<16x32xbf16>, vector<32x32xbf16>, vector<16x32xf32> -> vector<16x32xf32>
    %8 = arith.addf %3, %7 : vector<16x32xf32>
    %c0_6 = arith.constant 0 : index
    %c0_7 = arith.constant 0 : index
    %9 = vector.load %arg7[%c0_6, %c0_7] : memref<16x32xf32, #tpu.memory_space<vmem>>, vector<16x32xf32>
    tpu.vector_store %arg7[%c0_6, %c0_7], %8 {strides = array<i32>} : memref<16x32xf32, #tpu.memory_space<vmem>>, vector<16x32xf32>,
    %c0_i32_8 = arith.constant 0 : i32
    %10 = arith.cmpi eq, %arg2, %c0_i32_8 : i32
    %11 = arith.extui %10 : i1 to i32
    %c0_i32_9 = arith.constant 0 : i32
    %12 = arith.cmpi ne, %11, %c0_i32_9 : i32
    scf.if %12 {
      %c0_10 = arith.constant 0 : index
      %c0_11 = arith.constant 0 : index
      %13 = vector.load %arg7[%c0_10, %c0_11] : memref<16x32xf32, #tpu.memory_space<vmem>>, vector<16x32xf32>
      %c0_12 = arith.constant 0 : index
      %c0_13 = arith.constant 0 : index
      %14 = vector.load %arg5[%c0_12, %c0_13] : memref<1x32xf32, #tpu.memory_space<vmem>>, vector<1x32xf32>
      %15 = vector.broadcast %14 : vector<1x32xf32> to vector<16x32xf32>
      %16 = arith.addf %13, %15 : vector<16x32xf32>
      %17 = arith.truncf %16 : vector<16x32xf32> to vector<16x32xbf16>
      %c0_14 = arith.constant 0 : index
      %c0_15 = arith.constant 0 : index
      %18 = vector.load %arg6[%c0_14, %c0_15] : memref<16x32xbf16, #tpu.memory_space<vmem>>, vector<16x32xbf16>
      tpu.vector_store %arg6[%c0_14, %c0_15], %17 {strides = array<i32>} : memref<16x32xbf16, #tpu.memory_space<vmem>>, vector<16x32xbf16>,
    } else {
    }
    return
  }
  func.func @transform_0(%arg0: i32, %arg1: i32, %arg2: i32) -> (i32, i32) {
    %c0_i32 = arith.constant 0 : i32
    return %arg0, %arg2 : i32, i32
  }
  func.func @transform_1(%arg0: i32, %arg1: i32, %arg2: i32) -> (i32, i32) {
    %c0_i32 = arith.constant 0 : i32
    return %arg2, %arg1 : i32, i32
  }
  func.func @transform_2(%arg0: i32, %arg1: i32, %arg2: i32) -> (i32, i32) {
    %c0_i32 = arith.constant 0 : i32
    %c0_i32_0 = arith.constant 0 : i32
    return %c0_i32, %arg1 : i32, i32
  }
  func.func @transform_3(%arg0: i32, %arg1: i32, %arg2: i32) -> (i32, i32) {
    %c0_i32 = arith.constant 0 : i32
    return %arg0, %arg1 : i32, i32
  }
}

</mosaic_0001>

<llo_original>
// kernel: tpu_custom_call.1
$region0: #{tpu_custom_call.1}
  #allocation0 [shape = 'u32[]', space=smem, size = 0x4, offset = 0x4, fixed_abs, tag = 'smem constant byte address 0x4 - core index']
  #allocation1 [shape = 'u32[72,128]{1,0:T(1,128)}', space=vmem, size = 0x9000, scoped, tag = 'internal scratch']
  #allocation2 [shape = 'f32[16,32]{1,0:T(8,128)}', space=vmem, size = 0x2000, scoped, tag = 'scratch operand']
  %s0 = inlined_call_operand.hbm [shape: f32[16,32], index: 0, kind: input, shape index: {}]
  %s1 = inlined_call_operand.hbm [shape: bf16[32,32], index: 1, kind: input, shape index: {}]
  %s2 = inlined_call_operand.vmem [shape: f32[1,32], index: 2, kind: input, shape index: {}]
  %s3 = inlined_call_operand.hbm [shape: bf16[16,32], index: 3, kind: output, shape index: {}]
  %s4 = sld [smem:[#allocation0]]
  $region38: #{tpu_custom_call.1} parent=0
    _
  %s6 = ssub.s32 1, %s4
  %s7 = scalar_select 0, %s6, %s4
  $region1: #{tpu_custom_call.1} parent=0
    #allocation3 [shape = 'u8[8192]{0}', space=vmem, size = 0x2000, scoped, tag = 'input window, operand 0, single buffered']
    #allocation4 [shape = 's32[1]{0}', space=sflag, size = 0x4, scoped, tag = 'scoped memory for tpu_custom_call.1']
    #allocation5 [shape = 's32[1]{0}', space=sflag, size = 0x4, scoped, tag = 'scoped memory for tpu_custom_call.1']
    #allocation6 [shape = 'u8[8192]{0}', space=vmem, size = 0x2000, scoped, tag = 'input window, operand 1, single buffered']
    #allocation7 [shape = 's32[1]{0}', space=sflag, size = 0x4, scoped, tag = 'scoped memory for tpu_custom_call.1']
    #allocation8 [shape = 'u8[4096]{0}', space=vmem, size = 0x1000, scoped, tag = 'output window, operand 0, single buffered']
    %8 = vsyncpa [#allocation4], 0
    %9 = vsyncpa [#allocation7], 0
    %10 = vsyncpa [#allocation5], 0
    // Predicated region
    $region2: #{tpu_custom_call.1} parent=1 // pred_check
      _
    $region3: #{tpu_custom_call.1} parent=1 // pred_check_branch
      %12 = sbr.rel (0) target = $region5
    $region4: #{tpu_custom_call.1} parent=1 // pred_region
      %14 = vsyncadd [#allocation4], 0
      %s15 = sshll.u32 %s0, 4
      %s16 = int_to_ptr.hbm [resolvable:$true] %s15
      %s17 = sshll.u32 [#allocation3], 4
      %s18 = int_to_ptr.vmem [resolvable:$true] %s17
      %23 = dma.hbm_to_vmem [thread:$0]  %s16, 256, %s18, [#allocation4], 128, 128, 8
    $region5: #{tpu_custom_call.1} parent=1 // pred_fallthru
      _
    // Predicated region
    $region6: #{tpu_custom_call.1} parent=1 // pred_check
      _
    $region7: #{tpu_custom_call.1} parent=1 // pred_check_branch
      %25 = sbr.rel (0) target = $region9
    $region8: #{tpu_custom_call.1} parent=1 // pred_region
      %27 = vsyncadd [#allocation7], 0
      %s28 = sshll.u32 %s1, 4
      %s29 = int_to_ptr.hbm [resolvable:$true] %s28
      %s30 = sshll.u32 [#allocation6], 4
      %s31 = int_to_ptr.vmem [resolvable:$true] %s30
      %36 = dma.hbm_to_vmem [thread:$0]  %s29, 256, %s31, [#allocation7], 64, 64, 4
    $region9: #{tpu_custom_call.1} parent=1 // pred_fallthru
      _
    // Predicated region
    $region10: #{tpu_custom_call.1} parent=1 // pred_check
      _
    $region11: #{tpu_custom_call.1} parent=1 // pred_check_branch
      %38 = sbr.rel (0) target = $region13
    $region12: #{tpu_custom_call.1} parent=1 // pred_region
      _
    $region13: #{tpu_custom_call.1} parent=1 // pred_fallthru
      _
    // Predicated region
    $region14: #{tpu_custom_call.1} parent=1 // pred_check
      _
    $region15: #{tpu_custom_call.1} parent=1 // pred_check_branch
      %40 = sbr.rel (0) target = $region17
    $region16: #{tpu_custom_call.1} parent=1 // pred_region
      %42 = dma.done [#allocation4], 256
    $region17: #{tpu_custom_call.1} parent=1 // pred_fallthru
      _
    // Predicated region
    $region18: #{tpu_custom_call.1} parent=1 // pred_check
      _
    $region19: #{tpu_custom_call.1} parent=1 // pred_check_branch
      %44 = sbr.rel (0) target = $region21
    $region20: #{tpu_custom_call.1} parent=1 // pred_region
      %46 = dma.done [#allocation7], 256
    $region21: #{tpu_custom_call.1} parent=1 // pred_fallthru
      _
    %p48 = scmp.eq.s32.totalorder 0, 0
    // Predicated region
    $region22: #{tpu_custom_call.1} parent=1 // pred_check
      %p49 = pneg %p48
    $region23: #{tpu_custom_call.1} parent=1 // pred_check_branch
      %51 = sbr.rel (%p49) target = $region25
    $region24: #{tpu_custom_call.1} parent=1 // pred_region
      %vm52 = vcmask 261120
      %53 = vst.msk [vmem:[#allocation2] sm:$0xff] %vm52, 0.0
      %54 = vst.msk [vmem:[#allocation2 + $0x8] sm:$0xff] %vm52, 0.0
    $region25: #{tpu_custom_call.1} parent=1 // pred_fallthru
      _
    %v55 = vld [vmem:[#allocation2] sm:$0xff]
    %v56 = vld [vmem:[#allocation2 + $0x8] sm:$0xff]
    %v57 = vld [vmem:[#allocation3] sm:$0xff]
    %v58 = vld [vmem:[#allocation3 + $0x8] sm:$0xff]
    %v59 = vpack.c.bf16 %v58, %v57
    %v60 = vld [vmem:[#allocation6] sm:$0xf]
    %v61 = vld [vmem:[#allocation6 + $0x4] sm:$0xf]
    %v62 = vld [vmem:[#allocation6 + $0x8] sm:$0xf]
    %v63 = vld [vmem:[#allocation6 + $0xc] sm:$0xf]
    %v68 = vunpack.c.l.b16 %v60
    %v69 = vunpack.c.l.b16 %v61
    %v70 = vunpack.c.l.b16 %v62
    %v71 = vunpack.c.l.b16 %v63
    %v72 = vpack.c.b16 %v69, %v68
    %v73 = vpack.c.b16 %v71, %v70
    %vm76 = vcmask 261120
    %v78 = vsel %vm76, %v59, 0
    %80 = vmatpush.bf16.msra.mxu0 0
    %81 = vmatpush.bf16.msra.mxu0 0
    %82 = vmatpush.bf16.msra.mxu0 0
    %83 = vmatpush.bf16.msra.mxu0 0
    %84 = vmatpush.bf16.msra.mxu0 0
    %85 = vmatpush.bf16.msra.mxu0 0
    %86 = vmatpush.bf16.msra.mxu0 %v73
    %87 = vmatpush.bf16.msra.mxu0 %v72
    %88 = vmatmul.bf16.gmra.mxu0 %v78
    %v89 = vpop.f32.mrf.mxu0
    %v90 = vadd.f32 0.0, %v89
    %v91 = vpop.f32.mrf.mxu0
    %v92 = vadd.f32 0.0, %v91
    %93 = vdwg.mxu0
    %v94 = vadd.f32 %v55, %v90
    %v95 = vadd.f32 %v56, %v92
    %96 = vst.msk [vmem:[#allocation2] sm:$0xff] %vm76, %v94
    %97 = vst.msk [vmem:[#allocation2 + $0x8] sm:$0xff] %vm76, %v95
    // Predicated region
    $region26: #{tpu_custom_call.1} parent=1 // pred_check
      %p98 = pneg %p48
    $region27: #{tpu_custom_call.1} parent=1 // pred_check_branch
      %100 = sbr.rel (%p98) target = $region29
    $region28: #{tpu_custom_call.1} parent=1 // pred_region
      %v101 = vld [vmem:[#allocation2] sm:$0xff]
      %v102 = vld [vmem:[#allocation2 + $0x8] sm:$0xff]
      %v103 = vld [vmem:[%s2] sm:$0x1]
      %v105 = vperm.slane %v103, 0
      %v107 = vadd.f32 %v101, %v105
      %v108 = vadd.f32 %v102, %v105
      %v109 = vpack.c.bf16 %v107, %v107
      %v110 = vpack.c.bf16 %v108, %v108
      %vm111 = vcmask 257024
      %112 = vst.msk [vmem:[#allocation8] sm:$0xf] %vm111, %v109
      %113 = vst.msk [vmem:[#allocation8 + $0x4] sm:$0xf] %vm111, %v110
    $region29: #{tpu_custom_call.1} parent=1 // pred_fallthru
      _
    // Predicated region
    $region30: #{tpu_custom_call.1} parent=1 // pred_check
      _
    $region31: #{tpu_custom_call.1} parent=1 // pred_check_branch
      %115 = sbr.rel (0) target = $region33
    $region32: #{tpu_custom_call.1} parent=1 // pred_region
      %117 = vsyncadd [#allocation5], 0
      %s118 = sshll.u32 [#allocation8], 4
      %s119 = int_to_ptr.vmem [resolvable:$true] %s118
      %s120 = sshll.u32 %s3, 4
      %s121 = int_to_ptr.hbm [resolvable:$true] %s120
      %126 = dma.vmem_to_hbm [thread:$0]  %s119, 128, %s121, [#allocation5], 64, 64, 4
    $region33: #{tpu_custom_call.1} parent=1 // pred_fallthru
      _
    // Predicated region
    $region34: #{tpu_custom_call.1} parent=1 // pred_check
      _
    $region35: #{tpu_custom_call.1} parent=1 // pred_check_branch
      %128 = sbr.rel (0) target = $region37
    $region36: #{tpu_custom_call.1} parent=1 // pred_region
      %130 = dma.done [#allocation5], 128
    $region37: #{tpu_custom_call.1} parent=1 // pred_fallthru
      _
    %131 = vsyncpa [#allocation4], 1
    %132 = vsyncpa [#allocation7], 1
    %133 = vsyncpa [#allocation5], 1

</llo_original>
